<compile_context>
chip_gen: v6e
topology: v6e:2x2x1
jax: 0.10.0
libtpu: 0.0.40
codegen_flags: <defaults>
</compile_context>

<pallas_src>
import functools

import jax
import jax.numpy as jnp
from jax import lax
from jax.experimental import pallas as pl
from jax.experimental.pallas import tpu as pltpu

LN_EPS = 1e-5                    # torch.nn.LayerNorm default
NEG_INF = -1e30                  # finite "masked" bias (no NaN on fully-masked rows)
VMEM_LIMIT = 64 * 1024 * 1024    # explicit scoped-VMEM budget (<= physical on all gens)
ACT_DTYPE = jnp.bfloat16         # inter-kernel activation dtype (halves HBM handoffs)


def _cparams():
    return pltpu.CompilerParams(dimension_semantics=("parallel",),
                                vmem_limit_bytes=VMEM_LIMIT)


def _row_tile(M, target=512):
    # 512-row tiles approach the HBM roofline on v5e/v6e; single block when small.
    if M <= target:
        return M, 1
    return target, pl.cdiv(M, target)


# --------------------------------------------------------------------------
# Shared in-kernel math helpers (operate on jnp values, not refs)
# --------------------------------------------------------------------------
def _layernorm_f32(y, g, b):
    mu = jnp.mean(y, axis=-1, keepdims=True)
    var = jnp.mean((y - mu) ** 2, axis=-1, keepdims=True)
    return (y - mu) * lax.rsqrt(var + LN_EPS) * g + b


def _mha_out_res_ln(q, k, v, bias, res, wo, bo, g, b, *, nhead, scale):
    """Multi-head attention + out-proj + residual + LayerNorm for one batch element.

    q: (L, E); k, v: (S, E); bias: (1, S) or (L, S) f32 or None; res: (L, E) f32;
    wo: (E, E) bf16 (already (in, out)).  Head split via static lane slices; the
    head merge is folded into the per-head out-projection contraction (no concat).
    """
    L, E = q.shape
    Dh = E // nhead
    qs = (q.astype(jnp.float32) * scale).astype(jnp.bfloat16)   # fold 1/sqrt(Dh) into q
    kb = k.astype(jnp.bfloat16)
    vb = v.astype(jnp.bfloat16)
    y = jnp.zeros((L, E), jnp.float32)
    for h in range(nhead):                                      # static unroll over heads
        lo, hi = h * Dh, (h + 1) * Dh
        s = lax.dot_general(qs[:, lo:hi], kb[:, lo:hi],
                            (((1,), (1,)), ((), ())),
                            preferred_element_type=jnp.float32)         # (L, S)
        if bias is not None:
            s = s + bias
        m = jnp.max(s, axis=-1, keepdims=True)
        p = jnp.exp(s - m)
        p = p / jnp.sum(p, axis=-1, keepdims=True)                        # exact softmax
        oh = jnp.dot(p.astype(jnp.bfloat16), vb[:, lo:hi],
                     preferred_element_type=jnp.float32)                  # (L, Dh)
        y = y + jnp.dot(oh.astype(jnp.bfloat16), wo[lo:hi, :],
                        preferred_element_type=jnp.float32)               # (L, E)
    y = y + bo + res
    return _layernorm_f32(y, g, b)


# --------------------------------------------------------------------------
# Pallas kernels
# --------------------------------------------------------------------------
def _proj_posed_plain_kernel(x_ref, add_ref, wp_ref, bp_ref, wn_ref, bn_ref,
                             op_ref, on_ref):
    # op = (x + add) @ Wp + bp     (Q/K projections, pos-embedded input)
    # on =  x        @ Wn + bn     (V projection, raw input)
    x = x_ref[...]
    xp = (x.astype(jnp.float32) + add_ref[...].astype(jnp.float32)).astype(jnp.bfloat16)
    op_ref[...] = (jnp.dot(xp, wp_ref[...], preferred_element_type=jnp.float32)
                   + bp_ref[...]).astype(op_ref.dtype)
    on_ref[...] = (jnp.dot(x.astype(jnp.bfloat16), wn_ref[...],
                           preferred_element_type=jnp.float32)
                   + bn_ref[...]).astype(on_ref.dtype)


def _enc_self_attn_kernel(qk_ref, v_ref, kpm_ref, res_ref, wo_ref, bo_ref,
                          g_ref, b_ref, o_ref, *, nhead, scale):
    # One batch element: q/k come packed as (L, 2E); key-padding bias only.
    E = v_ref.shape[-1]
    qk = qk_ref[0]
    out = _mha_out_res_ln(qk[:, :E], qk[:, E:], v_ref[0], kpm_ref[0],
                          res_ref[0].astype(jnp.float32),
                          wo_ref[...], bo_ref[...], g_ref[...], b_ref[...],
                          nhead=nhead, scale=scale)
    o_ref[0] = out.astype(o_ref.dtype)


def _dec_self_attn_kernel(x_ref, qpos_ref, wqk_ref, bqk_ref, wv_ref, bv_ref,
                          am_ref, wo_ref, bo_ref, g_ref, b_ref, o_ref,
                          *, nhead, scale):
    # Fully fused decoder self-attention: Q/K/V projections + attention + out-proj
    # + residual + LayerNorm in one kernel (latency-bound decode path).
    x = x_ref[0]
    E = x.shape[-1]
    xp = (x.astype(jnp.float32) + qpos_ref[...].astype(jnp.float32)).astype(jnp.bfloat16)
    qk = (jnp.dot(xp, wqk_ref[...], preferred_element_type=jnp.float32) + bqk_ref[...])
    v = (jnp.dot(x.astype(jnp.bfloat16), wv_ref[...],
                 preferred_element_type=jnp.float32) + bv_ref[...])
    out = _mha_out_res_ln(qk[:, :E], qk[:, E:], v, am_ref[...],
                          x.astype(jnp.float32),
                          wo_ref[...], bo_ref[...], g_ref[...], b_ref[...],
                          nhead=nhead, scale=scale)
    o_ref[0] = out.astype(o_ref.dtype)


def _dec_cross_attn_kernel(x_ref, qpos_ref, wq_ref, bq_ref, k_ref, v_ref, kpm_ref,
                           wo_ref, bo_ref, g_ref, b_ref, o_ref, *, nhead, scale):
    # Fused cross-attention: Q projection + attention + out-proj + residual + LN.
    x = x_ref[0]
    xp = (x.astype(jnp.float32) + qpos_ref[...].astype(jnp.float32)).astype(jnp.bfloat16)
    q = (jnp.dot(xp, wq_ref[...], preferred_element_type=jnp.float32) + bq_ref[...])
    out = _mha_out_res_ln(q, k_ref[0], v_ref[0], kpm_ref[0],
                          x.astype(jnp.float32),
                          wo_ref[...], bo_ref[...], g_ref[...], b_ref[...],
                          nhead=nhead, scale=scale)
    o_ref[0] = out.astype(o_ref.dtype)


def _ffn_res_ln_kernel(x_ref, w1_ref, b1_ref, w2_ref, b2_ref, g_ref, bb_ref, o_ref):
    x = x_ref[...]
    h = (jnp.dot(x.astype(jnp.bfloat16), w1_ref[...],
                 preferred_element_type=jnp.float32) + b1_ref[...])
    h = jnp.maximum(h, 0.0)                                    # relu
    y = (jnp.dot(h.astype(jnp.bfloat16), w2_ref[...],
                 preferred_element_type=jnp.float32) + b2_ref[...])
    y = y + x.astype(jnp.float32)                              # residual
    o_ref[...] = _layernorm_f32(y, g_ref[...], bb_ref[...]).astype(o_ref.dtype)


def _ln_kernel(x_ref, g_ref, b_ref, o_ref):
    x = x_ref[...].astype(jnp.float32)
    o_ref[...] = _layernorm_f32(x, g_ref[...], b_ref[...]).astype(o_ref.dtype)


# --------------------------------------------------------------------------
# pallas_call wrappers
# --------------------------------------------------------------------------
def proj_posed_plain(x2d, add2d, w_posed_t, b_posed, w_plain_t, b_plain):
    M, E = x2d.shape
    Np = w_posed_t.shape[1]
    Nn = w_plain_t.shape[1]
    tm, g = _row_tile(M)
    return pl.pallas_call(
        _proj_posed_plain_kernel,
        grid=(g,),
        in_specs=[
            pl.BlockSpec((tm, E), lambda i: (i, 0)),
            pl.BlockSpec((tm, E), lambda i: (i, 0)),
            pl.BlockSpec((E, Np), lambda i: (0, 0)),
            pl.BlockSpec((1, Np), lambda i: (0, 0)),
            pl.BlockSpec((E, Nn), lambda i: (0, 0)),
            pl.BlockSpec((1, Nn), lambda i: (0, 0)),
        ],
        out_specs=(
            pl.BlockSpec((tm, Np), lambda i: (i, 0)),
            pl.BlockSpec((tm, Nn), lambda i: (i, 0)),
        ),
        out_shape=(
            jax.ShapeDtypeStruct((M, Np), ACT_DTYPE),
            jax.ShapeDtypeStruct((M, Nn), ACT_DTYPE),
        ),
        compiler_params=_cparams(),
    )(x2d, add2d, w_posed_t, b_posed.reshape(1, Np), w_plain_t, b_plain.reshape(1, Nn))


def ffn_res_ln(x2d, w1_t, b1, w2_t, b2, gamma, beta):
    M, E = x2d.shape
    F = w1_t.shape[1]
    tm, g = _row_tile(M)
    return pl.pallas_call(
        _ffn_res_ln_kernel,
        grid=(g,),
        in_specs=[
            pl.BlockSpec((tm, E), lambda i: (i, 0)),
            pl.BlockSpec((E, F), lambda i: (0, 0)),
            pl.BlockSpec((1, F), lambda i: (0, 0)),
            pl.BlockSpec((F, E), lambda i: (0, 0)),
            pl.BlockSpec((1, E), lambda i: (0, 0)),
            pl.BlockSpec((1, E), lambda i: (0, 0)),
            pl.BlockSpec((1, E), lambda i: (0, 0)),
        ],
        out_specs=pl.BlockSpec((tm, E), lambda i: (i, 0)),
        out_shape=jax.ShapeDtypeStruct((M, E), ACT_DTYPE),
        compiler_params=_cparams(),
    )(x2d, w1_t, b1.reshape(1, F), w2_t, b2.reshape(1, E),
      gamma.reshape(1, E), beta.reshape(1, E))


def layernorm(x2d, gamma, beta, out_dtype=ACT_DTYPE):
    M, D = x2d.shape
    tm, g = _row_tile(M)
    return pl.pallas_call(
        _ln_kernel,
        grid=(g,),
        in_specs=[
            pl.BlockSpec((tm, D), lambda i: (i, 0)),
            pl.BlockSpec((1, D), lambda i: (0, 0)),
            pl.BlockSpec((1, D), lambda i: (0, 0)),
        ],
        out_specs=pl.BlockSpec((tm, D), lambda i: (i, 0)),
        out_shape=jax.ShapeDtypeStruct((M, D), out_dtype),
        compiler_params=_cparams(),
    )(x2d, gamma.reshape(1, D), beta.reshape(1, D))


def enc_self_attn(qk, v, kpm_bias, res, wo_t, bo, ln_g, ln_b, nhead, scale):
    # qk: (B,L,2E) bf16; v/res: (B,L,E) bf16; kpm_bias: (B,1,L) f32.
    B, L, E2 = qk.shape
    E = v.shape[-1]
    S = kpm_bias.shape[-1]
    return pl.pallas_call(
        functools.partial(_enc_self_attn_kernel, nhead=nhead, scale=scale),
        grid=(B,),
        in_specs=[
            pl.BlockSpec((1, L, E2), lambda b: (b, 0, 0)),
            pl.BlockSpec((1, L, E), lambda b: (b, 0, 0)),
            pl.BlockSpec((1, 1, S), lambda b: (b, 0, 0)),
            pl.BlockSpec((1, L, E), lambda b: (b, 0, 0)),
            pl.BlockSpec((E, E), lambda b: (0, 0)),
            pl.BlockSpec((1, E), lambda b: (0, 0)),
            pl.BlockSpec((1, E), lambda b: (0, 0)),
            pl.BlockSpec((1, E), lambda b: (0, 0)),
        ],
        out_specs=pl.BlockSpec((1, L, E), lambda b: (b, 0, 0)),
        out_shape=jax.ShapeDtypeStruct((B, L, E), ACT_DTYPE),
        compiler_params=_cparams(),
    )(qk, v, kpm_bias, res, wo_t, bo.reshape(1, E),
      ln_g.reshape(1, E), ln_b.reshape(1, E))


def dec_self_attn(x, qpos, p, am_bias, ln_g, ln_b, nhead):
    # x: (B,T,E) bf16; qpos: (T,E) shared over batch; am_bias: (T,T) f32 (causal).
    B, T, E = x.shape
    Dh = E // nhead
    return pl.pallas_call(
        functools.partial(_dec_self_attn_kernel, nhead=nhead, scale=float(Dh) ** -0.5),
        grid=(B,),
        in_specs=[
            pl.BlockSpec((1, T, E), lambda b: (b, 0, 0)),
            pl.BlockSpec((T, E), lambda b: (0, 0)),
            pl.BlockSpec((E, 2 * E), lambda b: (0, 0)),
            pl.BlockSpec((1, 2 * E), lambda b: (0, 0)),
            pl.BlockSpec((E, E), lambda b: (0, 0)),
            pl.BlockSpec((1, E), lambda b: (0, 0)),
            pl.BlockSpec((T, T), lambda b: (0, 0)),
            pl.BlockSpec((E, E), lambda b: (0, 0)),
            pl.BlockSpec((1, E), lambda b: (0, 0)),
            pl.BlockSpec((1, E), lambda b: (0, 0)),
            pl.BlockSpec((1, E), lambda b: (0, 0)),
        ],
        out_specs=pl.BlockSpec((1, T, E), lambda b: (b, 0, 0)),
        out_shape=jax.ShapeDtypeStruct((B, T, E), ACT_DTYPE),
        compiler_params=_cparams(),
    )(x, qpos, p["wqk_t"], p["bqk"].reshape(1, 2 * E), p["wv_t"],
      p["bv"].reshape(1, E), am_bias, p["wo_t"], p["bo"].reshape(1, E),
      ln_g.reshape(1, E), ln_b.reshape(1, E))


def dec_cross_attn(x, qpos, k, v, kpm_bias, p, ln_g, ln_b, nhead):
    # x: (B,T,E) bf16; qpos: (T,E); k/v: (B,S,E) bf16; kpm_bias: (B,1,S) f32.
    B, T, E = x.shape
    S = k.shape[1]
    Dh = E // nhead
    return pl.pallas_call(
        functools.partial(_dec_cross_attn_kernel, nhead=nhead, scale=float(Dh) ** -0.5),
        grid=(B,),
        in_specs=[
            pl.BlockSpec((1, T, E), lambda b: (b, 0, 0)),
            pl.BlockSpec((T, E), lambda b: (0, 0)),
            pl.BlockSpec((E, E), lambda b: (0, 0)),
            pl.BlockSpec((1, E), lambda b: (0, 0)),
            pl.BlockSpec((1, S, E), lambda b: (b, 0, 0)),
            pl.BlockSpec((1, S, E), lambda b: (b, 0, 0)),
            pl.BlockSpec((1, 1, S), lambda b: (b, 0, 0)),
            pl.BlockSpec((E, E), lambda b: (0, 0)),
            pl.BlockSpec((1, E), lambda b: (0, 0)),
            pl.BlockSpec((1, E), lambda b: (0, 0)),
            pl.BlockSpec((1, E), lambda b: (0, 0)),
        ],
        out_specs=pl.BlockSpec((1, T, E), lambda b: (b, 0, 0)),
        out_shape=jax.ShapeDtypeStruct((B, T, E), ACT_DTYPE),
        compiler_params=_cparams(),
    )(x, qpos, p["wq_t"], p["bq"].reshape(1, E), k, v, kpm_bias,
      p["wo_t"], p["bo"].reshape(1, E), ln_g.reshape(1, E), ln_b.reshape(1, E))


# --------------------------------------------------------------------------
# Sub-layers / layers (batch-major (B, L, E) bf16 activations)
# --------------------------------------------------------------------------
def enc_self_attn_sublayer(x, pos, p, nhead, kpm_bias, ln_g, ln_b):
    B, L, E = x.shape
    Dh = E // nhead
    qk2d, v2d = proj_posed_plain(x.reshape(B * L, E), pos.reshape(B * L, E),
                                 p["wqk_t"], p["bqk"], p["wv_t"], p["bv"])
    return enc_self_attn(qk2d.reshape(B, L, 2 * E), v2d.reshape(B, L, E),
                         kpm_bias, x, p["wo_t"], p["bo"], ln_g, ln_b,
                         nhead, float(Dh) ** -0.5)


def ffn_sublayer(x, p, ln_g, ln_b):
    B, L, E = x.shape
    y = ffn_res_ln(x.reshape(B * L, E), p["lin1_wt"], p["lin1_b"],
                   p["lin2_wt"], p["lin2_b"], ln_g, ln_b)
    return y.reshape(B, L, E)


def encoder_layer_forward(src, p, nhead, kpm_bias, pos):
    src = enc_self_attn_sublayer(src, pos, p["self_attn"], nhead, kpm_bias,
                                 p["norm1_g"], p["norm1_b"])
    return ffn_sublayer(src, p, p["norm2_g"], p["norm2_b"])


def decoder_layer_forward(tgt, memory, mempos, p, nhead, self_am_bias,
                          cross_kpm_bias, query_pos):
    B, T, E = tgt.shape
    S = memory.shape[1]
    tgt = dec_self_attn(tgt, query_pos, p["self_attn"], self_am_bias,
                        p["norm1_g"], p["norm1_b"], nhead)
    k2d, v2d = proj_posed_plain(memory.reshape(B * S, E), mempos.reshape(B * S, E),
                                p["cross_attn"]["wk_t"], p["cross_attn"]["bk"],
                                p["cross_attn"]["wv_t"], p["cross_attn"]["bv"])
    tgt = dec_cross_attn(tgt, query_pos, k2d.reshape(B, S, E), v2d.reshape(B, S, E),
                         cross_kpm_bias, p["cross_attn"],
                         p["norm3_g"], p["norm3_b"], nhead)
    return ffn_sublayer(tgt, p, p["norm4_g"], p["norm4_b"])


# --------------------------------------------------------------------------
# Transformer forward (both branches)
# --------------------------------------------------------------------------
def transformer_encode(params, src, mask, query_embed_w, pos_embed,
                       text_attention_mask, text_memory_resized, nhead):
    bs, c, h, w = src.shape
    d_model = c
    src_b = jnp.transpose(src.reshape(bs, c, h * w), (0, 2, 1))       # (B, HW, D)
    pos_b = jnp.transpose(pos_embed.reshape(bs, c, h * w), (0, 2, 1))
    mask = mask.reshape(bs, h * w)
    query_embed = jnp.broadcast_to(query_embed_w[:, None, :],
                                   (query_embed_w.shape[0], bs, d_model))
    tgt = jnp.zeros_like(query_embed)                                 # pass_pos_and_query=True

    # TODO(synk): RoBERTa tokenizer/text-encoder/FeatureResizer path has no Pallas
    # equivalent; this follows the branch where text is already
    # (text_attention_mask, text_memory_resized, tokenized).
    text_b = jnp.transpose(text_memory_resized, (1, 0, 2))            # (B, Ltxt, D)
    src_b = jnp.concatenate([src_b, text_b], axis=1)
    mask = jnp.concatenate([mask, text_attention_mask], axis=1)       # (B, S) bool
    pos_b = jnp.concatenate([pos_b, jnp.zeros_like(text_b)], axis=1)

    kpm_bias = jnp.where(mask, NEG_INF, 0.0).astype(jnp.float32)[:, None, :]   # (B,1,S)

    output = src_b.astype(ACT_DTYPE)      # bf16 inter-kernel activations
    pos_a = pos_b.astype(ACT_DTYPE)
    feats = []
    for lp in params["encoder_layers"]:
        output = encoder_layer_forward(output, lp, nhead, kpm_bias, pos_a)
        feats.append(output)

    img_memory = jnp.transpose(output, (1, 0, 2)).astype(jnp.float32)  # (S, B, D); norm=None
    feats_list = jnp.transpose(jnp.stack(feats, axis=0),
                               (0, 2, 1, 3)).astype(jnp.float32)       # (nlayers, S, B, D)
    n_text = text_b.shape[1]
    text_memory = img_memory[-n_text:]
    pos_embed_out = jnp.transpose(pos_b, (1, 0, 2))                    # (S, B, D)

    assert img_memory.shape[1] == text_memory.shape[1] == tgt.shape[1]
    return {
        "text_memory_resized": text_memory_resized,
        "text_memory": text_memory,
        "img_memory": img_memory,
        "enc_feats": feats_list,
        "text_pooled_op": None,
        "img_pooled_op": None,
        "mask": mask,
        "text_attention_mask": text_attention_mask,
        "pos_embed": pos_embed_out,
        "query_embed": query_embed,
        "tokenized": None,
    }


def transformer_decode(params, prev_indx, img_memory, text_memory, mask,
                       text_attention_mask, pos_embed, nhead):
    B, T = prev_indx.shape
    d_model = img_memory.shape[-1]

    # DecoderEmbeddings: word + position embedding, LayerNorm (dropout = identity)
    word = jnp.take(params["emb_word"], prev_indx, axis=0)             # (B, T, D)
    posn = params["emb_pos"][:T][None, :, :]
    emb = (word + posn).reshape(B * T, d_model)
    tgt = layernorm(emb, params["emb_ln_g"], params["emb_ln_b"],
                    out_dtype=ACT_DTYPE).reshape(B, T, d_model)

    query_pos = params["emb_pos"][:T].astype(ACT_DTYPE)                # (T, D), batch-shared

    mem_b = jnp.transpose(img_memory, (1, 0, 2)).astype(ACT_DTYPE)     # (B, S, D)
    pos_b = jnp.transpose(pos_embed, (1, 0, 2)).astype(ACT_DTYPE)

    assert img_memory.shape[1] == text_memory.shape[1] == tgt.shape[0]

    # masks built ONCE (hoisted out of the per-layer loop)
    causal = ~jnp.tril(jnp.ones((T, T), dtype=bool))
    self_am_bias = jnp.where(causal, NEG_INF, 0.0).astype(jnp.float32)          # (T, T)
    cross_kpm_bias = jnp.where(mask, NEG_INF, 0.0).astype(jnp.float32)[:, None, :]
    # NOTE: reference decoder passes no tgt_key_padding_mask, so no self key-padding bias.

    output = tgt
    for lp in params["decoder_layers"]:
        output = decoder_layer_forward(output, mem_b, pos_b, lp, nhead,
                                       self_am_bias, cross_kpm_bias, query_pos)
    output = layernorm(output.reshape(B * T, d_model),
                       params["dec_norm_g"], params["dec_norm_b"],
                       out_dtype=jnp.float32).reshape(B, T, d_model)
    # return_intermediate=False; torch returns hs (T,B,D).transpose(1,2) -> (T, D, B)
    return jnp.transpose(output, (1, 2, 0))


# --------------------------------------------------------------------------
# Deterministic parameter construction
#   (weights pre-transposed to (in, out), pre-cast to bf16; maps from torch's
#    in_proj_weight rows [Wq; Wk; Wv] and nn.Linear (out, in) layout)
# --------------------------------------------------------------------------
def _init_self_attn(key, E):
    kq, kk, kv, ko = jax.random.split(key, 4)
    wq = 0.02 * jax.random.normal(kq, (E, E), jnp.float32)
    wk = 0.02 * jax.random.normal(kk, (E, E), jnp.float32)
    wv = 0.02 * jax.random.normal(kv, (E, E), jnp.float32)
    wo = 0.02 * jax.random.normal(ko, (E, E), jnp.float32)
    return {
        "wqk_t": jnp.concatenate([wq.T, wk.T], axis=1).astype(jnp.bfloat16),  # (E, 2E)
        "bqk": jnp.zeros((2 * E,), jnp.float32),
        "wv_t": wv.T.astype(jnp.bfloat16),
        "bv": jnp.zeros((E,), jnp.float32),
        "wo_t": wo.T.astype(jnp.bfloat16),
        "bo": jnp.zeros((E,), jnp.float32),
    }


def _init_cross_attn(key, E):
    kq, kk, kv, ko = jax.random.split(key, 4)
    return {
        "wq_t": (0.02 * jax.random.normal(kq, (E, E), jnp.float32)).T.astype(jnp.bfloat16),
        "bq": jnp.zeros((E,), jnp.float32),
        "wk_t": (0.02 * jax.random.normal(kk, (E, E), jnp.float32)).T.astype(jnp.bfloat16),
        "bk": jnp.zeros((E,), jnp.float32),
        "wv_t": (0.02 * jax.random.normal(kv, (E, E), jnp.float32)).T.astype(jnp.bfloat16),
        "bv": jnp.zeros((E,), jnp.float32),
        "wo_t": (0.02 * jax.random.normal(ko, (E, E), jnp.float32)).T.astype(jnp.bfloat16),
        "bo": jnp.zeros((E,), jnp.float32),
    }


def _init_enc_layer(key, E, F):
    k1, k2, k3 = jax.random.split(key, 3)
    return {
        "self_attn": _init_self_attn(k1, E),
        "lin1_wt": (0.02 * jax.random.normal(k2, (F, E), jnp.float32)).T.astype(jnp.bfloat16),
        "lin1_b": jnp.zeros((F,), jnp.float32),
        "lin2_wt": (0.02 * jax.random.normal(k3, (E, F), jnp.float32)).T.astype(jnp.bfloat16),
        "lin2_b": jnp.zeros((E,), jnp.float32),
        "norm1_g": jnp.ones((E,), jnp.float32), "norm1_b": jnp.zeros((E,), jnp.float32),
        "norm2_g": jnp.ones((E,), jnp.float32), "norm2_b": jnp.zeros((E,), jnp.float32),
    }


def _init_dec_layer(key, E, F):
    k1, k2, k3, k4 = jax.random.split(key, 4)
    return {
        "self_attn": _init_self_attn(k1, E),
        "cross_attn": _init_cross_attn(k2, E),
        "lin1_wt": (0.02 * jax.random.normal(k3, (F, E), jnp.float32)).T.astype(jnp.bfloat16),
        "lin1_b": jnp.zeros((F,), jnp.float32),
        "lin2_wt": (0.02 * jax.random.normal(k4, (E, F), jnp.float32)).T.astype(jnp.bfloat16),
        "lin2_b": jnp.zeros((E,), jnp.float32),
        "norm1_g": jnp.ones((E,), jnp.float32), "norm1_b": jnp.zeros((E,), jnp.float32),
        "norm3_g": jnp.ones((E,), jnp.float32), "norm3_b": jnp.zeros((E,), jnp.float32),
        "norm4_g": jnp.ones((E,), jnp.float32), "norm4_b": jnp.zeros((E,), jnp.float32),
    }


def init_params(key, d_model, dim_ff, num_enc, num_dec, vocab, max_dec, pad_id=1):
    keys = jax.random.split(key, num_enc + num_dec + 2)
    enc = [_init_enc_layer(keys[i], d_model, dim_ff) for i in range(num_enc)]
    dec = [_init_dec_layer(keys[num_enc + i], d_model, dim_ff) for i in range(num_dec)]
    kw, kp = jax.random.split(keys[-1])
    emb_word = 0.02 * jax.random.normal(kw, (vocab, d_model), jnp.float32)
    emb_word = emb_word.at[pad_id].set(0.0)   # padding_idx=1
    emb_pos = 0.02 * jax.random.normal(kp, (max_dec, d_model), jnp.float32)
    return {
        "encoder_layers": enc,
        "decoder_layers": dec,
        "dec_norm_g": jnp.ones((d_model,), jnp.float32),
        "dec_norm_b": jnp.zeros((d_model,), jnp.float32),
        "emb_word": emb_word,
        "emb_pos": emb_pos,
        "emb_ln_g": jnp.ones((d_model,), jnp.float32),
        "emb_ln_b": jnp.zeros((d_model,), jnp.float32),
    }


# --------------------------------------------------------------------------
if __name__ == "__main__":
    d_model, nhead = 32, 4
    num_enc, num_dec = 2, 2
    dim_ff = 64
    max_dec = 16
    num_queries = 8
    vocab = 50
    bs, h, w = 2, 4, 4
    Ltxt, T = 6, 5

    root = jax.random.PRNGKey(0)
    kp, k1, k2, k3, k4, k5 = jax.random.split(root, 6)
    params = init_params(kp, d_model, dim_ff, num_enc, num_dec, vocab, max_dec)

    src = jax.random.normal(k1, (bs, d_model, h, w), jnp.float32)       # NCHW
    pos_embed = jax.random.normal(k2, (bs, d_model, h, w), jnp.float32)
    mask = jnp.zeros((bs, h, w), dtype=bool)                             # False = valid
    query_embed_w = jax.random.normal(k3, (num_queries, d_model), jnp.float32)
    text_memory_resized = jax.random.normal(k4, (Ltxt, bs, d_model), jnp.float32)
    text_attention_mask = jnp.zeros((bs, Ltxt), dtype=bool).at[1, -2:].set(True)
    prev_indx = jax.random.randint(k5, (bs, T), 2, vocab, dtype=jnp.int32)

    # encode_and_save=True branch
    cache = transformer_encode(params, src, mask, query_embed_w, pos_embed,
                               text_attention_mask, text_memory_resized, nhead)
    jax.block_until_ready(cache["img_memory"])

    # encode_and_save=False branch
    hs = transformer_decode(params, prev_indx,
                            cache["img_memory"], cache["text_memory"],
                            cache["mask"], cache["text_attention_mask"],
                            cache["pos_embed"], nhead)
    jax.block_until_ready(hs)

    assert cache["img_memory"].shape == (h * w + Ltxt, bs, d_model)
    assert cache["enc_feats"].shape == (num_enc, h * w + Ltxt, bs, d_model)
    assert hs.shape == (T, d_model, bs)
    assert bool(jnp.all(jnp.isfinite(hs)))
    print("KERNEL_OK")
</pallas_src>

<mosaic_0001>
module attributes {stable_mosaic.version = 11 : i64} {
  func.func @_proj_posed_plain_kernel(%arg0: i32, %arg1: memref<44x32xbf16, #tpu.memory_space<vmem>>, %arg2: memref<44x32xbf16, #tpu.memory_space<vmem>>, %arg3: memref<32x64xbf16, #tpu.memory_space<vmem>>, %arg4: memref<1x64xf32, #tpu.memory_space<vmem>>, %arg5: memref<32x32xbf16, #tpu.memory_space<vmem>>, %arg6: memref<1x32xf32, #tpu.memory_space<vmem>>, %arg7: memref<44x64xbf16, #tpu.memory_space<vmem>>, %arg8: memref<44x32xbf16, #tpu.memory_space<vmem>>) attributes {dimension_semantics = [#tpu.dimension_semantics<parallel>], iteration_bounds = array<i64: 1>, scalar_prefetch = 0 : i64, scratch_operands = 0 : i64, tpu.core_type = #tpu.core_type<tc>, window_params = [{transform_indices = @transform_0, window_bounds = array<i64: 44, 32>}, {transform_indices = @transform_1, window_bounds = array<i64: 44, 32>}, {pipeline_mode = #tpu.pipeline_mode<synchronous>, transform_indices = @transform_2, window_bounds = array<i64: 32, 64>}, {pipeline_mode = #tpu.pipeline_mode<synchronous>, transform_indices = @transform_3, window_bounds = array<i64: 1, 64>}, {pipeline_mode = #tpu.pipeline_mode<synchronous>, transform_indices = @transform_4, window_bounds = array<i64: 32, 32>}, {pipeline_mode = #tpu.pipeline_mode<synchronous>, transform_indices = @transform_5, window_bounds = array<i64: 1, 32>}, {transform_indices = @transform_6, window_bounds = array<i64: 44, 64>}, {transform_indices = @transform_7, window_bounds = array<i64: 44, 32>}]} {
    %c0 = arith.constant 0 : index
    %c0_0 = arith.constant 0 : index
    %0 = vector.load %arg1[%c0, %c0_0] : memref<44x32xbf16, #tpu.memory_space<vmem>>, vector<44x32xbf16>
    %1 = arith.extf %0 : vector<44x32xbf16> to vector<44x32xf32>
    %c0_1 = arith.constant 0 : index
    %c0_2 = arith.constant 0 : index
    %2 = vector.load %arg2[%c0_1, %c0_2] : memref<44x32xbf16, #tpu.memory_space<vmem>>, vector<44x32xbf16>
    %3 = arith.extf %2 : vector<44x32xbf16> to vector<44x32xf32>
    %4 = arith.addf %1, %3 : vector<44x32xf32>
    %5 = arith.truncf %4 : vector<44x32xf32> to vector<44x32xbf16>
    %c0_3 = arith.constant 0 : index
    %c0_4 = arith.constant 0 : index
    %6 = vector.load %arg3[%c0_3, %c0_4] : memref<32x64xbf16, #tpu.memory_space<vmem>>, vector<32x64xbf16>
    %cst = arith.constant dense<0.000000e+00> : vector<44x64xf32>
    %7 = tpu.matmul %5, %6, %cst {dimension_numbers = #tpu.dot_dimension_numbers<[1], [0], [0], [1], [0, 0, 1, 1], [], []>} : vector<44x32xbf16>, vector<32x64xbf16>, vector<44x64xf32> -> vector<44x64xf32>
    %c0_5 = arith.constant 0 : index
    %c0_6 = arith.constant 0 : index
    %8 = vector.load %arg4[%c0_5, %c0_6] : memref<1x64xf32, #tpu.memory_space<vmem>>, vector<1x64xf32>
    %9 = vector.broadcast %8 : vector<1x64xf32> to vector<44x64xf32>
    %10 = arith.addf %7, %9 : vector<44x64xf32>
    %11 = arith.truncf %10 : vector<44x64xf32> to vector<44x64xbf16>
    %c0_7 = arith.constant 0 : index
    %c0_8 = arith.constant 0 : index
    %12 = vector.load %arg7[%c0_7, %c0_8] : memref<44x64xbf16, #tpu.memory_space<vmem>>, vector<44x64xbf16>
    tpu.vector_store %arg7[%c0_7, %c0_8], %11 {strides = array<i32>} : memref<44x64xbf16, #tpu.memory_space<vmem>>, vector<44x64xbf16>,
    %c0_9 = arith.constant 0 : index
    %c0_10 = arith.constant 0 : index
    %13 = vector.load %arg5[%c0_9, %c0_10] : memref<32x32xbf16, #tpu.memory_space<vmem>>, vector<32x32xbf16>
    %cst_11 = arith.constant dense<0.000000e+00> : vector<44x32xf32>
    %14 = tpu.matmul %0, %13, %cst_11 {dimension_numbers = #tpu.dot_dimension_numbers<[1], [0], [0], [1], [0, 0, 1, 1], [], []>} : vector<44x32xbf16>, vector<32x32xbf16>, vector<44x32xf32> -> vector<44x32xf32>
    %c0_12 = arith.constant 0 : index
    %c0_13 = arith.constant 0 : index
    %15 = vector.load %arg6[%c0_12, %c0_13] : memref<1x32xf32, #tpu.memory_space<vmem>>, vector<1x32xf32>
    %16 = vector.broadcast %15 : vector<1x32xf32> to vector<44x32xf32>
    %17 = arith.addf %14, %16 : vector<44x32xf32>
    %18 = arith.truncf %17 : vector<44x32xf32> to vector<44x32xbf16>
    %c0_14 = arith.constant 0 : index
    %c0_15 = arith.constant 0 : index
    %19 = vector.load %arg8[%c0_14, %c0_15] : memref<44x32xbf16, #tpu.memory_space<vmem>>, vector<44x32xbf16>
    tpu.vector_store %arg8[%c0_14, %c0_15], %18 {strides = array<i32>} : memref<44x32xbf16, #tpu.memory_space<vmem>>, vector<44x32xbf16>,
    return
  }
  func.func @transform_0(%arg0: i32) -> (i32, i32) {
    %c0_i32 = arith.constant 0 : i32
    %c0_i32_0 = arith.constant 0 : i32
    return %arg0, %c0_i32 : i32, i32
  }
  func.func @transform_1(%arg0: i32) -> (i32, i32) {
    %c0_i32 = arith.constant 0 : i32
    %c0_i32_0 = arith.constant 0 : i32
    return %arg0, %c0_i32 : i32, i32
  }
  func.func @transform_2(%arg0: i32) -> (i32, i32) {
    %c0_i32 = arith.constant 0 : i32
    %c0_i32_0 = arith.constant 0 : i32
    %c0_i32_1 = arith.constant 0 : i32
    return %c0_i32, %c0_i32_0 : i32, i32
  }
  func.func @transform_3(%arg0: i32) -> (i32, i32) {
    %c0_i32 = arith.constant 0 : i32
    %c0_i32_0 = arith.constant 0 : i32
    %c0_i32_1 = arith.constant 0 : i32
    return %c0_i32, %c0_i32_0 : i32, i32
  }
  func.func @transform_4(%arg0: i32) -> (i32, i32) {
    %c0_i32 = arith.constant 0 : i32
    %c0_i32_0 = arith.constant 0 : i32
    %c0_i32_1 = arith.constant 0 : i32
    return %c0_i32, %c0_i32_0 : i32, i32
  }
  func.func @transform_5(%arg0: i32) -> (i32, i32) {
    %c0_i32 = arith.constant 0 : i32
    %c0_i32_0 = arith.constant 0 : i32
    %c0_i32_1 = arith.constant 0 : i32
    return %c0_i32, %c0_i32_0 : i32, i32
  }
  func.func @transform_6(%arg0: i32) -> (i32, i32) {
    %c0_i32 = arith.constant 0 : i32
    %c0_i32_0 = arith.constant 0 : i32
    return %arg0, %c0_i32 : i32, i32
  }
  func.func @transform_7(%arg0: i32) -> (i32, i32) {
    %c0_i32 = arith.constant 0 : i32
    %c0_i32_0 = arith.constant 0 : i32
    return %arg0, %c0_i32 : i32, i32
  }
}

</mosaic_0001>

<llo_original>
// kernel: tpu_custom_call.1
$region0: #{tpu_custom_call.1}
  #allocation0 [shape = 'u32[]', space=smem, size = 0x4, offset = 0x4, fixed_abs, tag = 'smem constant byte address 0x4 - core index']
  #allocation1 [shape = 'u32[144,128]{1,0:T(1,128)}', space=vmem, size = 0x12000, scoped, tag = 'internal scratch']
  %s0 = inlined_call_operand.vmem [shape: bf16[44,32], index: 0, kind: input, shape index: {}]
  %s1 = inlined_call_operand.vmem [shape: bf16[44,32], index: 1, kind: input, shape index: {}]
  %s2 = inlined_call_operand.vmem [shape: bf16[32,64], index: 2, kind: input, shape index: {}]
  %s3 = inlined_call_operand.vmem [shape: f32[1,64], index: 3, kind: input, shape index: {}]
  %s4 = inlined_call_operand.vmem [shape: bf16[32,32], index: 4, kind: input, shape index: {}]
  %s5 = inlined_call_operand.vmem [shape: f32[1,32], index: 5, kind: input, shape index: {}]
  %s6 = inlined_call_operand.hbm [shape: bf16[44,64], index: 6, kind: output, shape index: {0}]
  %s7 = inlined_call_operand.vmem [shape: bf16[44,32], index: 7, kind: output, shape index: {1}]
  %8 = xla_tuple %s6, %s7
  %s9 = sld [smem:[#allocation0]]
  $region42: #{tpu_custom_call.1} parent=0
    _
  %s11 = ssub.s32 1, %s9
  %s12 = scalar_select 0, %s11, %s9
  $region1: #{tpu_custom_call.1} parent=0
    #allocation2 [shape = 'u8[12288]{0}', space=vmem, size = 0x3000, scoped, tag = 'output window, operand 0, single buffered']
    #allocation3 [shape = 's32[1]{0}', space=sflag, size = 0x4, scoped, tag = 'scoped memory for tpu_custom_call.1']
    %13 = vsyncpa [#allocation3], 0
    // Predicated region
    $region2: #{tpu_custom_call.1} parent=1 // pred_check
      _
    $region3: #{tpu_custom_call.1} parent=1 // pred_check_branch
      %15 = sbr.rel (0) target = $region5
    $region4: #{tpu_custom_call.1} parent=1 // pred_region
      _
    $region5: #{tpu_custom_call.1} parent=1 // pred_fallthru
      _
    // Predicated region
    $region6: #{tpu_custom_call.1} parent=1 // pred_check
      _
    $region7: #{tpu_custom_call.1} parent=1 // pred_check_branch
      %17 = sbr.rel (0) target = $region9
    $region8: #{tpu_custom_call.1} parent=1 // pred_region
      _
    $region9: #{tpu_custom_call.1} parent=1 // pred_fallthru
      _
    // Predicated region
    $region10: #{tpu_custom_call.1} parent=1 // pred_check
      _
    $region11: #{tpu_custom_call.1} parent=1 // pred_check_branch
      %19 = sbr.rel (0) target = $region13
    $region12: #{tpu_custom_call.1} parent=1 // pred_region
      _
    $region13: #{tpu_custom_call.1} parent=1 // pred_fallthru
      _
    // Predicated region
    $region14: #{tpu_custom_call.1} parent=1 // pred_check
      _
    $region15: #{tpu_custom_call.1} parent=1 // pred_check_branch
      %21 = sbr.rel (0) target = $region17
    $region16: #{tpu_custom_call.1} parent=1 // pred_region
      _
    $region17: #{tpu_custom_call.1} parent=1 // pred_fallthru
      _
    // Predicated region
    $region18: #{tpu_custom_call.1} parent=1 // pred_check
      _
    $region19: #{tpu_custom_call.1} parent=1 // pred_check_branch
      %23 = sbr.rel (0) target = $region21
    $region20: #{tpu_custom_call.1} parent=1 // pred_region
      _
    $region21: #{tpu_custom_call.1} parent=1 // pred_fallthru
      _
    // Predicated region
    $region22: #{tpu_custom_call.1} parent=1 // pred_check
      _
    $region23: #{tpu_custom_call.1} parent=1 // pred_check_branch
      %25 = sbr.rel (0) target = $region25
    $region24: #{tpu_custom_call.1} parent=1 // pred_region
      _
    $region25: #{tpu_custom_call.1} parent=1 // pred_fallthru
      _
    %v27 = vld [vmem:[%s0] sm:$0xf]
    %v28 = vld [vmem:[%s0 + $0x4] sm:$0xf]
    %v29 = vld [vmem:[%s0 + $0x8] sm:$0xf]
    %v30 = vld [vmem:[%s0 + $0xc] sm:$0xf]
    %v31 = vld [vmem:[%s0 + $0x10] sm:$0xf]
    %v32 = vld [vmem:[%s0 + $0x14] sm:$0x3]
    %v33 = vunpack.c.l.bf16 %v27
    %v34 = vunpack.c.l.bf16 %v28
    %v35 = vunpack.c.l.bf16 %v29
    %v36 = vunpack.c.l.bf16 %v30
    %v37 = vunpack.c.l.bf16 %v31
    %v38 = vunpack.c.l.bf16 %v32
    %v39 = vld [vmem:[%s1] sm:$0xf]
    %v40 = vld [vmem:[%s1 + $0x4] sm:$0xf]
    %v41 = vld [vmem:[%s1 + $0x8] sm:$0xf]
    %v42 = vld [vmem:[%s1 + $0xc] sm:$0xf]
    %v43 = vld [vmem:[%s1 + $0x10] sm:$0xf]
    %v44 = vld [vmem:[%s1 + $0x14] sm:$0x3]
    %v45 = vunpack.c.l.bf16 %v39
    %v46 = vunpack.c.l.bf16 %v40
    %v47 = vunpack.c.l.bf16 %v41
    %v48 = vunpack.c.l.bf16 %v42
    %v49 = vunpack.c.l.bf16 %v43
    %v50 = vunpack.c.l.bf16 %v44
    %v51 = vadd.f32 %v33, %v45
    %v52 = vadd.f32 %v34, %v46
    %v53 = vadd.f32 %v35, %v47
    %v54 = vadd.f32 %v36, %v48
    %v55 = vadd.f32 %v37, %v49
    %v56 = vadd.f32 %v38, %v50
    %v57 = vpack.c.bf16 %v52, %v51
    %v58 = vpack.c.bf16 %v54, %v53
    %v59 = vpack.c.bf16 %v56, %v55
    %v60 = vld [vmem:[%s2] sm:$0xf]
    %v61 = vld [vmem:[%s2 + $0x4] sm:$0xf]
    %v62 = vld [vmem:[%s2 + $0x8] sm:$0xf]
    %v63 = vld [vmem:[%s2 + $0xc] sm:$0xf]
    %v64 = vld [vmem:[%s3] sm:$0x1]
    %v66 = vlaneseq
    %v67 = vshrl.u32 %v66, 7
    %v68 = vsub.s32 0, %v67
    %v69 = vrot.slane %v64, %v68
    %v75 = vunpack.c.l.b16 %v60
    %v76 = vunpack.c.l.b16 %v61
    %v77 = vunpack.c.l.b16 %v62
    %v78 = vunpack.c.l.b16 %v63
    %v79 = vpack.c.b16 %v76, %v75
    %v80 = vpack.c.b16 %v78, %v77
    %vm83 = vcmask 261120
    %v85 = vsel %vm83, %v57, 0
    %v88 = vsel %vm83, %v58, 0
    %v91 = vsel %vm83, %v59, 0
    %93 = vmatprep.subr.bf16.mxu0 0
    %94 = vmatpush1.bf16.msra.mxu0 0
    %95 = vmatprep.subr.bf16.mxu0 0
    %96 = vmatpush1.bf16.msra.mxu0 0
    %97 = vmatprep.subr.bf16.mxu0 0
    %98 = vmatpush1.bf16.msra.mxu0 0
    %99 = vmatprep.subr.bf16.mxu0 0
    %100 = vmatpush1.bf16.msra.mxu0 0
    %101 = vmatprep.subr.bf16.mxu0 0
    %102 = vmatpush1.bf16.msra.mxu0 0
    %103 = vmatprep.subr.bf16.mxu0 0
    %104 = vmatpush1.bf16.msra.mxu0 0
    %105 = vmatprep.subr.bf16.mxu0 0
    %106 = vmatpush1.bf16.msra.mxu0 %v80
    %107 = vmatprep.subr.bf16.mxu0 0
    %108 = vmatpush1.bf16.msra.mxu0 %v79
    %109 = vmatprep.subr.bf16.mxu0 0
    %110 = vmatpush2.bf16.msra.mxu0 0
    %111 = vmatprep.subr.bf16.mxu0 0
    %112 = vmatpush2.bf16.msra.mxu0 0
    %113 = vmatprep.subr.bf16.mxu0 0
    %114 = vmatpush2.bf16.msra.mxu0 0
    %115 = vmatprep.subr.bf16.mxu0 0
    %116 = vmatpush2.bf16.msra.mxu0 0
    %117 = vmatprep.subr.bf16.mxu0 0
    %118 = vmatpush2.bf16.msra.mxu0 0
    %119 = vmatprep.subr.bf16.mxu0 0
    %120 = vmatpush2.bf16.msra.mxu0 0
    %121 = vmatprep.subr.bf16.mxu0 0
    %122 = vmatpush2.bf16.msra.mxu0 0
    %123 = vmatprep.subr.bf16.mxu0 0
    %124 = vmatpush2.bf16.msra.mxu0 0
    %125 = vmatprep.mubr.bf16.mxu0 0
    %126 = vmatmul.mubr.bf16.gmra.mxu0 %v85
    %v127 = vpop.f32.mrf.mxu0
    %v128 = vadd.f32 %v69, %v127
    %v129 = vpop.f32.mrf.mxu0
    %v130 = vpop.f32.mrf.mxu0
    %v131 = vadd.f32 %v69, %v130
    %v132 = vpop.f32.mrf.mxu0
    %133 = vmatprep.mubr.bf16.mxu0 0
    %134 = vmatmul.mubr.bf16.gmra.mxu0 %v88
    %v135 = vpop.f32.mrf.mxu0
    %v136 = vadd.f32 %v69, %v135
    %v137 = vpop.f32.mrf.mxu0
    %v138 = vpop.f32.mrf.mxu0
    %v139 = vadd.f32 %v69, %v138
    %v140 = vpop.f32.mrf.mxu0
    %141 = vmatprep.mubr.bf16.mxu0 0
    %142 = vmatmul.mubr.bf16.gmra.mxu0 %v91
    %v143 = vpop.f32.mrf.mxu0
    %v144 = vadd.f32 %v69, %v143
    %v145 = vpop.f32.mrf.mxu0
    %v146 = vpop.f32.mrf.mxu0
    %v147 = vadd.f32 %v69, %v146
    %v148 = vpop.f32.mrf.mxu0
    %149 = vdwg.mxu0
    %v150 = vpack.c.bf16 %v131, %v128
    %v151 = vpack.c.bf16 %v139, %v136
    %v152 = vpack.c.bf16 %v147, %v144
    %v156 = vunpack.c.l.b16 %v150
    %v157 = vunpack.c.h.b16 %v150
    %v158 = vunpack.c.l.b16 %v151
    %v159 = vunpack.c.h.b16 %v151
    %v160 = vunpack.c.l.b16 %v152
    %v161 = vunpack.c.h.b16 %v152
    %v162 = vpack.c.b16 %v156, %v156
    %v163 = vpack.c.b16 %v157, %v157
    %v164 = vpack.c.b16 %v158, %v158
    %v165 = vpack.c.b16 %v159, %v159
    %v166 = vpack.c.b16 %v160, %v160
    %v167 = vpack.c.b16 %v161, %v161
    %vm174 = vcmask 519168
    %175 = vst.msk [vmem:[#allocation2] sm:$0xf] %vm174, %v162
    %176 = vst.msk [vmem:[#allocation2 + $0x4] sm:$0xf] %vm174, %v163
    %177 = vst.msk [vmem:[#allocation2 + $0x8] sm:$0xf] %vm174, %v164
    %178 = vst.msk [vmem:[#allocation2 + $0xc] sm:$0xf] %vm174, %v165
    %179 = vst.msk [vmem:[#allocation2 + $0x10] sm:$0xf] %vm174, %v166
    %vm180 = vcmask 517120
    %181 = vst.msk [vmem:[#allocation2 + $0x14] sm:$0x3] %vm180, %v167
    %v182 = vld [vmem:[%s4] sm:$0xf]
    %v183 = vld [vmem:[%s4 + $0x4] sm:$0xf]
    %v184 = vld [vmem:[%s4 + $0x8] sm:$0xf]
    %v185 = vld [vmem:[%s4 + $0xc] sm:$0xf]
    %v186 = vld [vmem:[%s5] sm:$0x1]
    %v188 = vlaneseq
    %v189 = vshrl.u32 %v188, 7
    %v190 = vsub.s32 0, %v189
    %v191 = vrot.slane %v186, %v190
    %v199 = vunpack.c.l.b16 %v27
    %v200 = vunpack.c.l.b16 %v28
    %v201 = vunpack.c.l.b16 %v29
    %v202 = vunpack.c.l.b16 %v30
    %v203 = vunpack.c.l.b16 %v31
    %v204 = vunpack.c.l.b16 %v32
    %v205 = vpack.c.b16 %v200, %v199
    %v206 = vpack.c.b16 %v202, %v201
    %v207 = vpack.c.b16 %v204, %v203
    %v212 = vunpack.c.l.b16 %v182
    %v213 = vunpack.c.l.b16 %v183
    %v214 = vunpack.c.l.b16 %v184
    %v215 = vunpack.c.l.b16 %v185
    %v216 = vpack.c.b16 %v213, %v212
    %v217 = vpack.c.b16 %v215, %v214
    %v221 = vsel %vm83, %v205, 0
    %v224 = vsel %vm83, %v206, 0
    %v227 = vsel %vm83, %v207, 0
    %229 = vmatprep.subr.bf16.mxu0 0
    %230 = vmatpush1.bf16.msra.mxu0 0
    %231 = vmatprep.subr.bf16.mxu0 0
    %232 = vmatpush1.bf16.msra.mxu0 0
    %233 = vmatprep.subr.bf16.mxu0 0
    %234 = vmatpush1.bf16.msra.mxu0 0
    %235 = vmatprep.subr.bf16.mxu0 0
    %236 = vmatpush1.bf16.msra.mxu0 0
    %237 = vmatprep.subr.bf16.mxu0 0
    %238 = vmatpush1.bf16.msra.mxu0 0
    %239 = vmatprep.subr.bf16.mxu0 0
    %240 = vmatpush1.bf16.msra.mxu0 0
    %241 = vmatprep.subr.bf16.mxu0 0
    %242 = vmatpush1.bf16.msra.mxu0 %v217
    %243 = vmatprep.subr.bf16.mxu0 0
    %244 = vmatpush1.bf16.msra.mxu0 %v216
    %245 = vmatprep.subr.bf16.mxu0 0
    %246 = vmatpush2.bf16.msra.mxu0 0
    %247 = vmatprep.subr.bf16.mxu0 0
    %248 = vmatpush2.bf16.msra.mxu0 0
    %249 = vmatprep.subr.bf16.mxu0 0
    %250 = vmatpush2.bf16.msra.mxu0 0
    %251 = vmatprep.subr.bf16.mxu0 0
    %252 = vmatpush2.bf16.msra.mxu0 0
    %253 = vmatprep.subr.bf16.mxu0 0
    %254 = vmatpush2.bf16.msra.mxu0 0
    %255 = vmatprep.subr.bf16.mxu0 0
    %256 = vmatpush2.bf16.msra.mxu0 0
    %257 = vmatprep.subr.bf16.mxu0 0
    %258 = vmatpush2.bf16.msra.mxu0 0
    %259 = vmatprep.subr.bf16.mxu0 0
    %260 = vmatpush2.bf16.msra.mxu0 0
    %261 = vmatprep.mubr.bf16.mxu0 0
    %262 = vmatmul.mubr.bf16.gmra.mxu0 %v221
    %v263 = vpop.f32.mrf.mxu0
    %v264 = vadd.f32 %v191, %v263
    %v265 = vpop.f32.mrf.mxu0
    %v266 = vpop.f32.mrf.mxu0
    %v267 = vadd.f32 %v191, %v266
    %v268 = vpop.f32.mrf.mxu0
    %269 = vmatprep.mubr.bf16.mxu0 0
    %270 = vmatmul.mubr.bf16.gmra.mxu0 %v224
    %v271 = vpop.f32.mrf.mxu0
    %v272 = vadd.f32 %v191, %v271
    %v273 = vpop.f32.mrf.mxu0
    %v274 = vpop.f32.mrf.mxu0
    %v275 = vadd.f32 %v191, %v274
    %v276 = vpop.f32.mrf.mxu0
    %277 = vmatprep.mubr.bf16.mxu0 0
    %278 = vmatmul.mubr.bf16.gmra.mxu0 %v227
    %v279 = vpop.f32.mrf.mxu0
    %v280 = vadd.f32 %v191, %v279
    %v281 = vpop.f32.mrf.mxu0
    %v282 = vpop.f32.mrf.mxu0
    %v283 = vadd.f32 %v191, %v282
    %v284 = vpop.f32.mrf.mxu0
    %285 = vdwg.mxu0
    %v286 = vpack.c.bf16 %v267, %v264
    %v287 = vpack.c.bf16 %v275, %v272
    %v288 = vpack.c.bf16 %v283, %v280
    %v292 = vunpack.c.l.b16 %v286
    %v293 = vunpack.c.h.b16 %v286
    %v294 = vunpack.c.l.b16 %v287
    %v295 = vunpack.c.h.b16 %v287
    %v296 = vunpack.c.l.b16 %v288
    %v297 = vunpack.c.h.b16 %v288
    %v298 = vpack.c.b16 %v292, %v292
    %v299 = vpack.c.b16 %v293, %v293
    %v300 = vpack.c.b16 %v294, %v294
    %v301 = vpack.c.b16 %v295, %v295
    %v302 = vpack.c.b16 %v296, %v296
    %v303 = vpack.c.b16 %v297, %v297
    %vm310 = vcmask 257024
    %311 = vst.msk [vmem:[%s7] sm:$0xf] %vm310, %v298
    %312 = vst.msk [vmem:[%s7 + $0x4] sm:$0xf] %vm310, %v299
    %313 = vst.msk [vmem:[%s7 + $0x8] sm:$0xf] %vm310, %v300
    %314 = vst.msk [vmem:[%s7 + $0xc] sm:$0xf] %vm310, %v301
    %315 = vst.msk [vmem:[%s7 + $0x10] sm:$0xf] %vm310, %v302
    %vm316 = vcmask 254976
    %317 = vst.msk [vmem:[%s7 + $0x14] sm:$0x3] %vm316, %v303
    // Predicated region
    $region26: #{tpu_custom_call.1} parent=1 // pred_check
      _
    $region27: #{tpu_custom_call.1} parent=1 // pred_check_branch
      %319 = sbr.rel (0) target = $region29
    $region28: #{tpu_custom_call.1} parent=1 // pred_region
      %s321 = ssub.s32 384, 384
      %322 = vsyncadd [#allocation3], %s321
      %s323 = sshll.u32 [#allocation2], 4
      %s324 = int_to_ptr.vmem [resolvable:$true] %s323
      %329 = dma.vmem_to_hbm [thread:$0]  %s324, 384, %s6, [#allocation3], 64, 64, 4
    $region29: #{tpu_custom_call.1} parent=1 // pred_fallthru
      _
    // Predicated region
    $region30: #{tpu_custom_call.1} parent=1 // pred_check
      _
    $region31: #{tpu_custom_call.1} parent=1 // pred_check_branch
      %331 = sbr.rel (0) target = $region33
    $region32: #{tpu_custom_call.1} parent=1 // pred_region
      _
    $region33: #{tpu_custom_call.1} parent=1 // pred_fallthru
      _
    // Predicated region
    $region34: #{tpu_custom_call.1} parent=1 // pred_check
      _
    $region35: #{tpu_custom_call.1} parent=1 // pred_check_branch
      %333 = sbr.rel (0) target = $region37
    $region36: #{tpu_custom_call.1} parent=1 // pred_region
      %334 = dma.done [#allocation3], 384
    $region37: #{tpu_custom_call.1} parent=1 // pred_fallthru
      _
    // Predicated region
    $region38: #{tpu_custom_call.1} parent=1 // pred_check
      _
    $region39: #{tpu_custom_call.1} parent=1 // pred_check_branch
      %336 = sbr.rel (0) target = $region41
    $region40: #{tpu_custom_call.1} parent=1 // pred_region
      _
    $region41: #{tpu_custom_call.1} parent=1 // pred_fallthru
      _
    %337 = vsyncpa [#allocation3], 1

</llo_original>
